<compile_context>
chip_gen: v7x
topology: tpu7x:2x2x1
jax: 0.10.0
libtpu: 0.0.40
codegen_flags: <defaults>
</compile_context>

<pallas_src>
import jax
import jax.numpy as jnp
from jax import lax
from jax.experimental import pallas as pl
from jax.experimental.pallas import tpu as pltpu

EPS = 1e-5          # BatchNorm1d eps (PyTorch default)
NEG_SLOPE = 0.2     # GATConv leaky_relu negative_slope (DGL default)
NEG_INF = -1e9      # additive mask value used in f32 score space


def _vmem_capacity_bytes():
    try:
        return int(pltpu.get_tpu_info().vmem_capacity_bytes)
    except Exception:
        return 128 * 1024 * 1024


def _full_vmem(n):
    # whole-array, single-buffered VMEM operands (constant across the grid)
    return [pl.BlockSpec(memory_space=pltpu.MemorySpace.VMEM) for _ in range(n)]


# ---------------------------------------------------------------------------
# Kernel 1: batched per-head projection   feat_all = x @ W_all,  scores = feat @ A
# ---------------------------------------------------------------------------
def proj_kernel(x_ref, w_ref, attn_ref, feat_ref, scores_ref):
    # x:(TQ,F) bf16   w:(F,H*D) bf16   attn:(H*D,2H) f32 (block-diag [el | er])
    feat = jnp.dot(x_ref[...], w_ref[...], preferred_element_type=jnp.float32)
    scores_ref[...] = jnp.dot(feat, attn_ref[...],
                              preferred_element_type=jnp.float32)          # (TQ, 2H)
    feat_ref[...] = feat.astype(jnp.bfloat16)


# ---------------------------------------------------------------------------
# Kernel 2: edge-softmax attention, tiled over destination-node rows
# ---------------------------------------------------------------------------
def _attn_kernel_factory(n_heads, head_dim):
    dp = head_dim + 1   # per-head feat width incl. the ones column

    def attn_kernel(feat_ref, el_ref, er_ref, bias_ref, adj_ref, hasin_ref,
                    out_ref, acc_ref):
        # feat:(N,H*(D+1)) bf16   el:(H,N) f32   er:(TQ,H) f32   bias:(1,H*D) f32
        # adj:(TQ,N) int8 incoming-edge adjacency   hasin:(TQ,1) f32 (0/1)
        edge = adj_ref[...].astype(jnp.float32) > 0.5      # bool mask, head-invariant
        el_all = el_ref[...]                                # (H, N)  src scores
        er_all = er_ref[...]                                # (TQ, H) dst scores

        for h in range(n_heads):                            # small static unroll
            e = er_all[:, h:h + 1] + el_all[h:h + 1, :]     # (TQ,N) VPU broadcast add
            e = jnp.maximum(e, NEG_SLOPE * e)               # LeakyReLU(0.2)
            e = jnp.where(edge, e, NEG_INF)                 # mask non-edges
            m = jnp.max(e, axis=-1, keepdims=True)
            p = jnp.exp(e - m).astype(jnp.bfloat16)
            # rst AND softmax denominator from ONE matmul (ones column in feat)
            res = jnp.dot(p, feat_ref[:, h * dp:(h + 1) * dp],
                          preferred_element_type=jnp.float32)       # (TQ, D+1)
            rst = res[:, :head_dim] * pl.reciprocal(res[:, head_dim:], approx=True)
            acc_ref[:, h * head_dim:(h + 1) * head_dim] = rst

        # zero-in-degree destinations (incl. padding rows) -> 0 + bias
        # (DGL allow_zero_in_degree=True semantics; DGL's default raises instead)
        out_ref[...] = acc_ref[...] * hasin_ref[...] + bias_ref[...]

    return attn_kernel


# ---------------------------------------------------------------------------
# Kernel 3a: feed_forward core = BN1-apply (precomputed stats) -> Linear -> ReLU -> Linear
# ---------------------------------------------------------------------------
def ff_core_kernel(h_ref, mu1_ref, rs1_ref, g1_ref, be1_ref,
                   w1_ref, b1_ref, w2_ref, b2_ref, y_ref):
    hn = (h_ref[...] - mu1_ref[...]) * rs1_ref[...] * g1_ref[...] + be1_ref[...]
    z = jnp.dot(hn.astype(jnp.bfloat16), w1_ref[...],
                preferred_element_type=jnp.float32) + b1_ref[...]
    z = jnp.maximum(z, 0.0)                                              # ReLU
    y_ref[...] = jnp.dot(z.astype(jnp.bfloat16), w2_ref[...],
                         preferred_element_type=jnp.float32) + b2_ref[...]


# ---------------------------------------------------------------------------
# Kernel 3b: BN2 apply (precomputed batch stats)
# ---------------------------------------------------------------------------
def bn_apply_kernel(y_ref, mu_ref, rs_ref, g_ref, b_ref, out_ref):
    out_ref[...] = (y_ref[...] - mu_ref[...]) * rs_ref[...] * g_ref[...] + b_ref[...]
    # TODO(synk): BatchNorm1d running-stat buffer updates (training side effect)
    # are stateful and not reproduced here.


# ---------------------------------------------------------------------------
# Wrapper
# ---------------------------------------------------------------------------
def attention_layer2(x, adj, params, *, n_heads, tq=None):
    """x: (N, embed_dim) node features; adj: (N, N), adj[u, v]=1 iff edge u->v."""
    N, E = x.shape
    H = n_heads
    D = E // H

    # --- VMEM-aware tile / limit selection --------------------------------------
    vmem_cap = _vmem_capacity_bytes()
    vmem_limit = min(vmem_cap * 3 // 4, 96 * 1024 * 1024)
    if tq is None:
        tq = 128 if vmem_cap <= 64 * 1024 * 1024 else 256   # smaller tiles on v7x
    cparams = pltpu.CompilerParams(dimension_semantics=("parallel",),
                                   vmem_limit_bytes=vmem_limit)

    # --- destination-row tiling ---------------------------------------------------
    if N > tq:
        TQ = tq
        N_pad = ((N + TQ - 1) // TQ) * TQ
    else:
        TQ = N
        N_pad = N
    num_tiles = N_pad // TQ
    pad_n = N_pad - N

    x_p = x.astype(jnp.bfloat16)
    adj_p = adj
    if pad_n:
        x_p = jnp.pad(x_p, ((0, pad_n), (0, 0)))
        adj_p = jnp.pad(adj_p, ((0, pad_n), (0, pad_n)))

    # int8 incoming-edge adjacency (adj_in[v,u] = 1 iff edge u->v): the N^2 stream.
    adj_in = (adj_p.T > 0).astype(jnp.int8)
    # host-side zero-in-degree flag per destination (avoids in-kernel XLU reduce)
    has_in = (jnp.sum(adj_p, axis=0) > 0).astype(jnp.float32).reshape(N_pad, 1)

    # --- batched GAT weights (host-side layout plumbing) --------------------------
    w_all = jnp.transpose(params["gat_w"], (1, 0, 2)).reshape(E, H * D).astype(jnp.bfloat16)
    eye = jnp.eye(H, dtype=jnp.float32)
    attn_l = params["attn_l"][:, :, 0]                 # (H, D)
    attn_r = params["attn_r"][:, :, 0]                 # (H, D)
    L = (attn_l[:, :, None] * eye[:, None, :]).reshape(H * D, H)   # block-diag
    R = (attn_r[:, :, None] * eye[:, None, :]).reshape(H * D, H)
    attn_cat = jnp.concatenate([L, R], axis=1)         # (H*D, 2H)  -> [el | er]

    # --- projection kernel (tiled, parallel) --------------------------------------
    proj = pl.pallas_call(
        proj_kernel,
        out_shape=(jax.ShapeDtypeStruct((N_pad, H * D), jnp.bfloat16),
                   jax.ShapeDtypeStruct((N_pad, 2 * H), jnp.float32)),
        grid=(num_tiles,),
        in_specs=[pl.BlockSpec((TQ, E), lambda i: (i, 0))] + _full_vmem(2),
        out_specs=(pl.BlockSpec((TQ, H * D), lambda i: (i, 0)),
                   pl.BlockSpec((TQ, 2 * H), lambda i: (i, 0))),
        compiler_params=cparams,
    )
    feat_bf16, scores = proj(x_p, w_all, attn_cat)

    # append a per-head ones column -> softmax denominator comes out of the MXU
    feat_aug = jnp.concatenate(
        [feat_bf16.reshape(N_pad, H, D),
         jnp.ones((N_pad, H, 1), jnp.bfloat16)], axis=-1).reshape(N_pad, H * (D + 1))

    el_t = jnp.transpose(scores[:, :H])                # (H, N_pad)  src scores per head
    er = scores[:, H:]                                 # (N_pad, H)  dst scores per head

    # --- attention kernel (tiled over destination rows, parallel) -----------------
    attn = pl.pallas_call(
        _attn_kernel_factory(H, D),
        out_shape=jax.ShapeDtypeStruct((N_pad, E), jnp.float32),
        grid=(num_tiles,),
        in_specs=(_full_vmem(2)                                        # feat_aug, el
                  + [pl.BlockSpec((TQ, H), lambda i: (i, 0))]          # er tile
                  + _full_vmem(1)                                      # bias
                  + [pl.BlockSpec((TQ, N_pad), lambda i: (i, 0)),      # adj int8 tile
                     pl.BlockSpec((TQ, 1), lambda i: (i, 0))]),        # has_in tile
        out_specs=pl.BlockSpec((TQ, E), lambda i: (i, 0)),
        scratch_shapes=[pltpu.VMEM((TQ, E), jnp.float32)],             # head-slab acc
        compiler_params=cparams,
    )
    h_gat = attn(feat_aug, el_t, er, params["gat_bias"], adj_in, has_in)   # (N_pad, E)

    # --- feed-forward --------------------------------------------------------------
    hid = params["w1"].shape[1]
    hid_pad = ((hid + 127) // 128) * 128
    w1 = jnp.pad(params["w1"], ((0, 0), (0, hid_pad - hid))).astype(jnp.bfloat16)
    b1 = jnp.pad(params["b1"], ((0, 0), (0, hid_pad - hid)))
    w2 = jnp.pad(params["w2"], ((0, hid_pad - hid), (0, 0))).astype(jnp.bfloat16)

    # BN1 batch stats (training mode, biased variance) over the N valid rows
    h_valid = h_gat[:N]
    mu1 = jnp.mean(h_valid, axis=0, keepdims=True)
    var1 = jnp.mean(jnp.square(h_valid - mu1), axis=0, keepdims=True)
    rs1 = lax.rsqrt(var1 + EPS)

    ff_core = pl.pallas_call(
        ff_core_kernel,
        out_shape=jax.ShapeDtypeStruct((N_pad, E), jnp.float32),
        grid=(num_tiles,),
        in_specs=[pl.BlockSpec((TQ, E), lambda i: (i, 0))] + _full_vmem(8),
        out_specs=pl.BlockSpec((TQ, E), lambda i: (i, 0)),
        compiler_params=cparams,
    )
    y = ff_core(h_gat, mu1, rs1, params["bn1_g"], params["bn1_b"],
                w1, b1, w2, params["b2"])                                # (N_pad, E)

    # BN2 batch stats over the N valid rows
    y_valid = y[:N]
    mu2 = jnp.mean(y_valid, axis=0, keepdims=True)
    var2 = jnp.mean(jnp.square(y_valid - mu2), axis=0, keepdims=True)
    rs2 = lax.rsqrt(var2 + EPS)

    bn2 = pl.pallas_call(
        bn_apply_kernel,
        out_shape=jax.ShapeDtypeStruct((N_pad, E), jnp.float32),
        grid=(num_tiles,),
        in_specs=[pl.BlockSpec((TQ, E), lambda i: (i, 0))] + _full_vmem(4),
        out_specs=pl.BlockSpec((TQ, E), lambda i: (i, 0)),
        compiler_params=cparams,
    )
    out = bn2(y, mu2, rs2, params["bn2_g"], params["bn2_b"])
    return out[:N]


def init_params(key, embed_dim, n_heads, hidden_dim):
    D = embed_dim // n_heads
    ks = jax.random.split(key, 8)
    return {
        # GATConv: fc weight (per head), attention vectors, output bias
        "gat_w":   jax.random.normal(ks[0], (n_heads, embed_dim, D), jnp.float32) * 0.2,
        "attn_l":  jax.random.normal(ks[1], (n_heads, D, 1), jnp.float32) * 0.2,
        "attn_r":  jax.random.normal(ks[2], (n_heads, D, 1), jnp.float32) * 0.2,
        "gat_bias": jax.random.normal(ks[3], (1, embed_dim), jnp.float32) * 0.05,
        # feed_forward
        "bn1_g": jnp.ones((1, embed_dim), jnp.float32),
        "bn1_b": jnp.zeros((1, embed_dim), jnp.float32),
        "w1": jax.random.normal(ks[4], (embed_dim, hidden_dim), jnp.float32) * 0.1,
        "b1": jax.random.normal(ks[5], (1, hidden_dim), jnp.float32) * 0.1,
        "w2": jax.random.normal(ks[6], (hidden_dim, embed_dim), jnp.float32) * 0.1,
        "b2": jax.random.normal(ks[7], (1, embed_dim), jnp.float32) * 0.1,
        "bn2_g": jnp.ones((1, embed_dim), jnp.float32),
        "bn2_b": jnp.zeros((1, embed_dim), jnp.float32),
    }


if __name__ == "__main__":
    N, embed_dim, n_heads, hidden_dim = 8, 32, 4, 64
    key = jax.random.PRNGKey(0)
    kx, kp = jax.random.split(key)

    x = jax.random.normal(kx, (N, embed_dim), jnp.float32)

    # Deterministic small graph: directed ring + self-loops (no zero-in-degree).
    src = jnp.arange(N)
    dst = (src + 1) % N
    adj = jnp.eye(N, dtype=jnp.float32).at[src, dst].set(1.0)

    params = init_params(kp, embed_dim, n_heads, hidden_dim)

    out = attention_layer2(x, adj, params, n_heads=n_heads)
    out = jax.block_until_ready(out)

    assert out.shape == (N, embed_dim)
    assert bool(jnp.all(jnp.isfinite(out)))
    print("KERNEL_OK")
</pallas_src>

<mosaic_0001>
module attributes {stable_mosaic.version = 11 : i64} {
  func.func @proj_kernel(%arg0: i32, %arg1: memref<8x32xbf16, #tpu.memory_space<vmem>>, %arg2: memref<32x32xbf16, #tpu.memory_space<vmem>>, %arg3: memref<32x8xf32, #tpu.memory_space<vmem>>, %arg4: memref<8x32xbf16, #tpu.memory_space<vmem>>, %arg5: memref<8x8xf32, #tpu.memory_space<vmem>>) attributes {dimension_semantics = [#tpu.dimension_semantics<parallel>], iteration_bounds = array<i64: 1>, scalar_prefetch = 0 : i64, scratch_operands = 0 : i64, tpu.core_type = #tpu.core_type<tc>, window_params = [{transform_indices = @transform_0, window_bounds = array<i64: 8, 32>}, {pipeline_mode = #tpu.pipeline_mode<synchronous>, transform_indices = @transform_1, window_bounds = array<i64: 32, 32>}, {pipeline_mode = #tpu.pipeline_mode<synchronous>, transform_indices = @transform_2, window_bounds = array<i64: 32, 8>}, {transform_indices = @transform_3, window_bounds = array<i64: 8, 32>}, {transform_indices = @transform_4, window_bounds = array<i64: 8, 8>}]} {
    %c0 = arith.constant 0 : index
    %c0_0 = arith.constant 0 : index
    %0 = vector.load %arg1[%c0, %c0_0] : memref<8x32xbf16, #tpu.memory_space<vmem>>, vector<8x32xbf16>
    %c0_1 = arith.constant 0 : index
    %c0_2 = arith.constant 0 : index
    %1 = vector.load %arg2[%c0_1, %c0_2] : memref<32x32xbf16, #tpu.memory_space<vmem>>, vector<32x32xbf16>
    %cst = arith.constant dense<0.000000e+00> : vector<8x32xf32>
    %2 = tpu.matmul %0, %1, %cst {dimension_numbers = #tpu.dot_dimension_numbers<[1], [0], [0], [1], [0, 0, 1, 1], [], []>} : vector<8x32xbf16>, vector<32x32xbf16>, vector<8x32xf32> -> vector<8x32xf32>
    %c0_3 = arith.constant 0 : index
    %c0_4 = arith.constant 0 : index
    %3 = vector.load %arg3[%c0_3, %c0_4] : memref<32x8xf32, #tpu.memory_space<vmem>>, vector<32x8xf32>
    %cst_5 = arith.constant dense<0.000000e+00> : vector<8x8xf32>
    %4 = tpu.matmul %2, %3, %cst_5 {dimension_numbers = #tpu.dot_dimension_numbers<[1], [0], [0], [1], [0, 0, 1, 1], [], []>} : vector<8x32xf32>, vector<32x8xf32>, vector<8x8xf32> -> vector<8x8xf32>
    %c0_6 = arith.constant 0 : index
    %c0_7 = arith.constant 0 : index
    %5 = vector.load %arg5[%c0_6, %c0_7] : memref<8x8xf32, #tpu.memory_space<vmem>>, vector<8x8xf32>
    tpu.vector_store %arg5[%c0_6, %c0_7], %4 {strides = array<i32>} : memref<8x8xf32, #tpu.memory_space<vmem>>, vector<8x8xf32>,
    %6 = arith.truncf %2 : vector<8x32xf32> to vector<8x32xbf16>
    %c0_8 = arith.constant 0 : index
    %c0_9 = arith.constant 0 : index
    %7 = vector.load %arg4[%c0_8, %c0_9] : memref<8x32xbf16, #tpu.memory_space<vmem>>, vector<8x32xbf16>
    tpu.vector_store %arg4[%c0_8, %c0_9], %6 {strides = array<i32>} : memref<8x32xbf16, #tpu.memory_space<vmem>>, vector<8x32xbf16>,
    return
  }
  func.func @transform_0(%arg0: i32) -> (i32, i32) {
    %c0_i32 = arith.constant 0 : i32
    %c0_i32_0 = arith.constant 0 : i32
    return %arg0, %c0_i32 : i32, i32
  }
  func.func @transform_1(%arg0: i32) -> (i32, i32) {
    %c0_i32 = arith.constant 0 : i32
    %c0_i32_0 = arith.constant 0 : i32
    %c0_i32_1 = arith.constant 0 : i32
    return %c0_i32, %c0_i32_0 : i32, i32
  }
  func.func @transform_2(%arg0: i32) -> (i32, i32) {
    %c0_i32 = arith.constant 0 : i32
    %c0_i32_0 = arith.constant 0 : i32
    %c0_i32_1 = arith.constant 0 : i32
    return %c0_i32, %c0_i32_0 : i32, i32
  }
  func.func @transform_3(%arg0: i32) -> (i32, i32) {
    %c0_i32 = arith.constant 0 : i32
    %c0_i32_0 = arith.constant 0 : i32
    return %arg0, %c0_i32 : i32, i32
  }
  func.func @transform_4(%arg0: i32) -> (i32, i32) {
    %c0_i32 = arith.constant 0 : i32
    %c0_i32_0 = arith.constant 0 : i32
    return %arg0, %c0_i32 : i32, i32
  }
}

</mosaic_0001>

<llo_original>
// kernel: tpu_custom_call.1
$region0: #{tpu_custom_call.1}
  #allocation0 [shape = 'u32[]', space=smem, size = 0x4, offset = 0x4, fixed_abs, tag = 'smem constant byte address 0x4 - core index']
  #allocation1 [shape = 'u32[144,128]{1,0:T(1,128)}', space=vmem, size = 0x12000, scoped, tag = 'internal scratch']
  %s0 = inlined_call_operand.hbm [shape: bf16[8,32], index: 0, kind: input, shape index: {}]
  %s1 = inlined_call_operand.hbm [shape: bf16[32,32], index: 1, kind: input, shape index: {}]
  %s2 = inlined_call_operand.hbm [shape: f32[32,8], index: 2, kind: input, shape index: {}]
  %s3 = inlined_call_operand.hbm [shape: bf16[8,32], index: 3, kind: output, shape index: {0}]
  %s4 = inlined_call_operand.hbm [shape: f32[8,8], index: 4, kind: output, shape index: {1}]
  %5 = xla_tuple %s3, %s4
  %s6 = sld [smem:[#allocation0]]
  $region42: #{tpu_custom_call.1} parent=0
    _
  %s8 = ssub.s32 1, %s6
  %s9 = scalar_select 0, %s8, %s6
  $region1: #{tpu_custom_call.1} parent=0
    #allocation2 [shape = 'u8[2048]{0}', space=vmem, size = 0x800, scoped, tag = 'input window, operand 0, single buffered']
    #allocation3 [shape = 's32[1]{0}', space=sflag, size = 0x4, scoped, tag = 'scoped memory for tpu_custom_call.1']
    #allocation4 [shape = 's32[1]{0}', space=sflag, size = 0x4, scoped, tag = 'scoped memory for tpu_custom_call.1']
    #allocation5 [shape = 'u8[8192]{0}', space=vmem, size = 0x2000, scoped, tag = 'input window, operand 1, single buffered']
    #allocation6 [shape = 's32[1]{0}', space=sflag, size = 0x4, scoped, tag = 'scoped memory for tpu_custom_call.1']
    #allocation7 [shape = 'u8[16384]{0}', space=vmem, size = 0x4000, scoped, tag = 'input window, operand 2, single buffered']
    #allocation8 [shape = 'u8[2048]{0}', space=vmem, size = 0x800, scoped, tag = 'output window, operand 0, single buffered']
    #allocation9 [shape = 'u8[4096]{0}', space=vmem, size = 0x1000, scoped, tag = 'output window, operand 1, single buffered']
    #allocation10 [shape = 's32[1]{0}', space=sflag, size = 0x4, scoped, tag = 'scoped memory for tpu_custom_call.1']
    %10 = vsyncpa [#allocation3], 0
    %11 = vsyncpa [#allocation6], 0
    %12 = vsyncpa [#allocation4], 0
    %13 = vsyncpa [#allocation10], 0
    // Predicated region
    $region2: #{tpu_custom_call.1} parent=1 // pred_check
      _
    $region3: #{tpu_custom_call.1} parent=1 // pred_check_branch
      %15 = sbr.rel (0) target = $region5
    $region4: #{tpu_custom_call.1} parent=1 // pred_region
      %s17 = ssub.s32 64, 64
      %18 = vsyncadd [#allocation3], %s17
      %s20 = sshll.u32 [#allocation2], 4
      %s21 = int_to_ptr.vmem [resolvable:$true] %s20
      %23 = dma.hbm_to_vmem [thread:$0]  %s0, 64, %s21, [#allocation3]
    $region5: #{tpu_custom_call.1} parent=1 // pred_fallthru
      _
    // Predicated region
    $region6: #{tpu_custom_call.1} parent=1 // pred_check
      _
    $region7: #{tpu_custom_call.1} parent=1 // pred_check_branch
      %25 = sbr.rel (0) target = $region9
    $region8: #{tpu_custom_call.1} parent=1 // pred_region
      %s27 = ssub.s32 256, 256
      %28 = vsyncadd [#allocation6], %s27
      %s29 = sshll.u32 [#allocation5], 4
      %s30 = int_to_ptr.vmem [resolvable:$true] %s29
      %35 = dma.hbm_to_vmem [thread:$0]  %s1, 256, %s30, [#allocation6], 64, 64, 4
    $region9: #{tpu_custom_call.1} parent=1 // pred_fallthru
      _
    // Predicated region
    $region10: #{tpu_custom_call.1} parent=1 // pred_check
      _
    $region11: #{tpu_custom_call.1} parent=1 // pred_check_branch
      %37 = sbr.rel (0) target = $region13
    $region12: #{tpu_custom_call.1} parent=1 // pred_region
      %s39 = ssub.s32 512, 512
      %40 = vsyncadd [#allocation6], %s39
      %s41 = sshll.u32 [#allocation7], 4
      %s42 = int_to_ptr.vmem [resolvable:$true] %s41
      %47 = dma.hbm_to_vmem [thread:$0]  %s2, 512, %s42, [#allocation6], 128, 128, 8
    $region13: #{tpu_custom_call.1} parent=1 // pred_fallthru
      _
    // Predicated region
    $region14: #{tpu_custom_call.1} parent=1 // pred_check
      _
    $region15: #{tpu_custom_call.1} parent=1 // pred_check_branch
      %49 = sbr.rel (0) target = $region17
    $region16: #{tpu_custom_call.1} parent=1 // pred_region
      %50 = dma.done [#allocation3], 64
    $region17: #{tpu_custom_call.1} parent=1 // pred_fallthru
      _
    // Predicated region
    $region18: #{tpu_custom_call.1} parent=1 // pred_check
      _
    $region19: #{tpu_custom_call.1} parent=1 // pred_check_branch
      %52 = sbr.rel (0) target = $region21
    $region20: #{tpu_custom_call.1} parent=1 // pred_region
      %53 = dma.done [#allocation6], 256
    $region21: #{tpu_custom_call.1} parent=1 // pred_fallthru
      _
    // Predicated region
    $region22: #{tpu_custom_call.1} parent=1 // pred_check
      _
    $region23: #{tpu_custom_call.1} parent=1 // pred_check_branch
      %55 = sbr.rel (0) target = $region25
    $region24: #{tpu_custom_call.1} parent=1 // pred_region
      %56 = dma.done [#allocation6], 512
    $region25: #{tpu_custom_call.1} parent=1 // pred_fallthru
      _
    %v58 = vld [vmem:[#allocation2] sm:$0xf]
    %v59 = vld [vmem:[#allocation5] sm:$0xf]
    %v60 = vld [vmem:[#allocation5 + $0x4] sm:$0xf]
    %v61 = vld [vmem:[#allocation5 + $0x8] sm:$0xf]
    %v62 = vld [vmem:[#allocation5 + $0xc] sm:$0xf]
    %v67 = vunpack.c.l.b16 %v59
    %v68 = vunpack.c.l.b16 %v60
    %v69 = vunpack.c.l.b16 %v61
    %v70 = vunpack.c.l.b16 %v62
    %v71 = vpack.c.b16 %v68, %v67
    %v72 = vpack.c.b16 %v70, %v69
    %vm75 = vcmask 261120
    %v77 = vsel %vm75, %v58, 0
    %79 = vmatprep.subr.bf16.mxu0 0
    %80 = vmatpush1.bf16.msra.mxu0 %v71
    %81 = vmatprep.subr.bf16.mxu0 0
    %82 = vmatpush1.bf16.msra.mxu0 %v72
    %83 = vmatprep.subr.bf16.mxu0 0
    %84 = vmatpush1.bf16.msra.mxu0 0
    %85 = vmatprep.subr.bf16.mxu0 0
    %86 = vmatpush1.bf16.msra.mxu0 0
    %87 = vmatprep.subr.bf16.mxu0 0
    %88 = vmatpush1.bf16.msra.mxu0 0
    %89 = vmatprep.subr.bf16.mxu0 0
    %90 = vmatpush1.bf16.msra.mxu0 0
    %91 = vmatprep.subr.bf16.mxu0 0
    %92 = vmatpush1.bf16.msra.mxu0 0
    %93 = vmatprep.subr.bf16.mxu0 0
    %94 = vmatpush1.bf16.msra.mxu0 0
    %95 = vmatprep.subr.bf16.mxu0 0
    %96 = vmatpush1.bf16.msra.mxu0 0
    %97 = vmatprep.subr.bf16.mxu0 0
    %98 = vmatpush1.bf16.msra.mxu0 0
    %99 = vmatprep.subr.bf16.mxu0 0
    %100 = vmatpush1.bf16.msra.mxu0 0
    %101 = vmatprep.subr.bf16.mxu0 0
    %102 = vmatpush1.bf16.msra.mxu0 0
    %103 = vmatprep.subr.bf16.mxu0 0
    %104 = vmatpush1.bf16.msra.mxu0 0
    %105 = vmatprep.subr.bf16.mxu0 0
    %106 = vmatpush1.bf16.msra.mxu0 0
    %107 = vmatprep.subr.bf16.mxu0 0
    %108 = vmatpush1.bf16.msra.mxu0 0
    %109 = vmatprep.subr.bf16.mxu0 0
    %110 = vmatpush1.bf16.msra.mxu0 0
    %111 = vmatprep.mubr.bf16.mxu0 0
    %112 = vmatmul.mubr.bf16.gmra.mrb[0].mxu0 %v77
    %v113 = vpop.f32.mrb[0].mxu0
    %v114 = vadd.f32 0.0, %v113
    %v115 = vpop.f32.mrb[0].mxu0
    %v116 = vpop.f32.mrb[0].mxu0
    %v117 = vpop.f32.mrb[0].mxu0
    %118 = vdwg.mxu0
    %v119 = vld [vmem:[#allocation7] sm:$0xff]
    %v120 = vld [vmem:[#allocation7 + $0x8] sm:$0xff]
    %v121 = vld [vmem:[#allocation7 + $0x10] sm:$0xff]
    %v122 = vld [vmem:[#allocation7 + $0x18] sm:$0xff]
    %v124 = vsel %vm75, %v114, 0
    %126 = vmatprep.subr.mxu0 0.0
    %127 = vmatpush1.msra.mxu0 %v119
    %128 = vmatprep.subr.mxu0 0.0
    %129 = vmatpush1.msra.mxu0 %v120
    %130 = vmatprep.subr.mxu0 0.0
    %131 = vmatpush1.msra.mxu0 %v121
    %132 = vmatprep.subr.mxu0 0.0
    %133 = vmatpush1.msra.mxu0 %v122
    %134 = vmatprep.subr.mxu0 0.0
    %135 = vmatpush1.msra.mxu0 0.0
    %136 = vmatprep.subr.mxu0 0.0
    %137 = vmatpush1.msra.mxu0 0.0
    %138 = vmatprep.subr.mxu0 0.0
    %139 = vmatpush1.msra.mxu0 0.0
    %140 = vmatprep.subr.mxu0 0.0
    %141 = vmatpush1.msra.mxu0 0.0
    %142 = vmatprep.subr.mxu0 0.0
    %143 = vmatpush1.msra.mxu0 0.0
    %144 = vmatprep.subr.mxu0 0.0
    %145 = vmatpush1.msra.mxu0 0.0
    %146 = vmatprep.subr.mxu0 0.0
    %147 = vmatpush1.msra.mxu0 0.0
    %148 = vmatprep.subr.mxu0 0.0
    %149 = vmatpush1.msra.mxu0 0.0
    %150 = vmatprep.subr.mxu0 0.0
    %151 = vmatpush1.msra.mxu0 0.0
    %152 = vmatprep.subr.mxu0 0.0
    %153 = vmatpush1.msra.mxu0 0.0
    %154 = vmatprep.subr.mxu0 0.0
    %155 = vmatpush1.msra.mxu0 0.0
    %156 = vmatprep.subr.mxu0 0.0
    %157 = vmatpush1.msra.mxu0 0.0
    %158 = vmatprep.subr.mxu0 0.0
    %159 = vmatpush1.msra.mxu0 0.0
    %160 = vmatprep.subr.mxu0 0.0
    %161 = vmatpush1.msra.mxu0 0.0
    %162 = vmatprep.subr.mxu0 0.0
    %163 = vmatpush1.msra.mxu0 0.0
    %164 = vmatprep.subr.mxu0 0.0
    %165 = vmatpush1.msra.mxu0 0.0
    %166 = vmatprep.subr.mxu0 0.0
    %167 = vmatpush1.msra.mxu0 0.0
    %168 = vmatprep.subr.mxu0 0.0
    %169 = vmatpush1.msra.mxu0 0.0
    %170 = vmatprep.subr.mxu0 0.0
    %171 = vmatpush1.msra.mxu0 0.0
    %172 = vmatprep.subr.mxu0 0.0
    %173 = vmatpush1.msra.mxu0 0.0
    %174 = vmatprep.subr.mxu0 0.0
    %175 = vmatpush1.msra.mxu0 0.0
    %176 = vmatprep.subr.mxu0 0.0
    %177 = vmatpush1.msra.mxu0 0.0
    %178 = vmatprep.subr.mxu0 0.0
    %179 = vmatpush1.msra.mxu0 0.0
    %180 = vmatprep.subr.mxu0 0.0
    %181 = vmatpush1.msra.mxu0 0.0
    %182 = vmatprep.subr.mxu0 0.0
    %183 = vmatpush1.msra.mxu0 0.0
    %184 = vmatprep.subr.mxu0 0.0
    %185 = vmatpush1.msra.mxu0 0.0
    %186 = vmatprep.subr.mxu0 0.0
    %187 = vmatpush1.msra.mxu0 0.0
    %188 = vmatprep.subr.mxu0 0.0
    %189 = vmatpush1.msra.mxu0 0.0
    %190 = vmatprep.mubr.f32.mxu0 0.0
    %191 = vmatmul.mubr.f32.gmra.mrb[0].mxu0 %v124
    %v192 = vpop.f32.mrb[0].mxu0
    %v193 = vadd.f32 0.0, %v192
    %v194 = vpop.f32.mrb[0].mxu0
    %195 = vdwg.mxu0
    %vm196 = vcmask 64512
    %197 = vst.msk [vmem:[#allocation9] sm:$0xff] %vm196, %v193
    %v198 = vpack.c.bf16 %v114, %v114
    %vm199 = vcmask 257024
    %200 = vst.msk [vmem:[#allocation8] sm:$0xf] %vm199, %v198
    // Predicated region
    $region26: #{tpu_custom_call.1} parent=1 // pred_check
      _
    $region27: #{tpu_custom_call.1} parent=1 // pred_check_branch
      %202 = sbr.rel (0) target = $region29
    $region28: #{tpu_custom_call.1} parent=1 // pred_region
      %s204 = ssub.s32 64, 64
      %205 = vsyncadd [#allocation4], %s204
      %s207 = sshll.u32 [#allocation8], 4
      %s208 = int_to_ptr.vmem [resolvable:$true] %s207
      %210 = dma.vmem_to_hbm [thread:$0]  %s208, 64, %s3, [#allocation4]
    $region29: #{tpu_custom_call.1} parent=1 // pred_fallthru
      _
    // Predicated region
    $region30: #{tpu_custom_call.1} parent=1 // pred_check
      _
    $region31: #{tpu_custom_call.1} parent=1 // pred_check_branch
      %212 = sbr.rel (0) target = $region33
    $region32: #{tpu_custom_call.1} parent=1 // pred_region
      %s214 = ssub.s32 128, 128
      %215 = vsyncadd [#allocation10], %s214
      %s217 = sshll.u32 [#allocation9], 4
      %s218 = int_to_ptr.vmem [resolvable:$true] %s217
      %220 = dma.vmem_to_hbm [thread:$0]  %s218, 128, %s4, [#allocation10]
    $region33: #{tpu_custom_call.1} parent=1 // pred_fallthru
      _
    // Predicated region
    $region34: #{tpu_custom_call.1} parent=1 // pred_check
      _
    $region35: #{tpu_custom_call.1} parent=1 // pred_check_branch
      %222 = sbr.rel (0) target = $region37
    $region36: #{tpu_custom_call.1} parent=1 // pred_region
      %223 = dma.done [#allocation4], 64
    $region37: #{tpu_custom_call.1} parent=1 // pred_fallthru
      _
    // Predicated region
    $region38: #{tpu_custom_call.1} parent=1 // pred_check
      _
    $region39: #{tpu_custom_call.1} parent=1 // pred_check_branch
      %225 = sbr.rel (0) target = $region41
    $region40: #{tpu_custom_call.1} parent=1 // pred_region
      %226 = dma.done [#allocation10], 128
    $region41: #{tpu_custom_call.1} parent=1 // pred_fallthru
      _
    %227 = vsyncpa [#allocation3], 1
    %228 = vsyncpa [#allocation6], 1
    %229 = vsyncpa [#allocation4], 1
    %230 = vsyncpa [#allocation10], 1

</llo_original>
